<compile_context>
chip_gen: v6e
topology: v6e:2x2x1
jax: 0.10.0
libtpu: 0.0.40
codegen_flags: <defaults>
</compile_context>

<pallas_src>
import jax
import jax.numpy as jnp
from jax.experimental import pallas as pl
from jax.experimental.pallas import tpu as pltpu


def _conv3(v, axis, w0, w1, w2, b, dil, idx):
    """Single-channel 1-D conv, kernel=3, 'same' zero padding, dilation `dil`.

    out[i] = w0 * v[i - dil] + w1 * v[i] + w2 * v[i + dil] + b

    Implemented with non-negative pltpu.roll shifts + edge masks (jnp.roll
    semantics: out[i] = in[(i - shift) mod L]).  Correct ONLY because the conv
    axis is full-extent inside the block — tiling T or F would make the roll
    wrap within the tile and silently corrupt the edge taps.
    """
    L = v.shape[axis]
    left = jnp.where(idx >= dil, pltpu.roll(v, shift=dil, axis=axis), 0.0)
    right = jnp.where(idx < L - dil, pltpu.roll(v, shift=L - dil, axis=axis), 0.0)
    return w0 * left + w1 * v + w2 * right + b


def tf_attention_kernel(params_ref, x_ref, o_ref):
    # params_ref: SMEM (2, 9); row 0 = t-path, row 1 = f-path
    #   cols = [c1w0, c1w1, c1w2, c1b, c2w0, c2w1, c2w2, c2b, prelu_alpha]
    x = x_ref[...].astype(jnp.float32)                     # (Bblk, T, F)
    # EUP approx reciprocal only when the HBM dtype is bf16 (precision is bounded
    # by the bf16 store anyway); exact divide for f32 I/O.
    approx = jnp.dtype(o_ref.dtype) == jnp.dtype(jnp.bfloat16)

    def branch(v, axis, row):
        p = [params_ref[row, j] for j in range(9)]         # SMEM scalar reads, hoisted
        # iota built once per branch and reused by both conv layers
        # (JAX does not CSE broadcast_in_dim).
        idx = jax.lax.broadcasted_iota(jnp.int32, v.shape, axis)
        h = _conv3(v, axis, p[0], p[1], p[2], p[3], 1, idx)   # Conv1d k=3, pad=1, dil=1
        h = _conv3(h, axis, p[4], p[5], p[6], p[7], 2, idx)   # Conv1d k=3, pad=2, dil=2
        h = jnp.where(h >= 0.0, h, p[8] * h)                  # PReLU
        return pl.reciprocal(1.0 + jnp.exp(-h), approx=approx)  # sigmoid (exp -> EUP)

    # t-path: AdaptiveAvgPool2d((1, None)) == mean over T; conv runs along F (lanes).
    out_t = branch(jnp.mean(x, axis=1, keepdims=True), axis=2, row=0)   # (Bblk, 1, F)
    # f-path: AdaptiveAvgPool2d((None, 1)) == mean over F; conv runs along T (sublanes).
    # TODO(synk): a (Bblk, 1, T) lane-dense layout for this branch would move the
    # sublane rolls onto full-width lanes; only worth it if profiling shows XLU/VALU
    # pressure after the bf16-I/O change.
    out_f = branch(jnp.mean(x, axis=2, keepdims=True), axis=1, row=1)   # (Bblk, T, 1)

    # attention_w = output_f @ output_t is a rank-1 outer product; fuse it into the
    # elementwise scale (2 VALU muls per vreg) instead of a K=1 MXU matmul + temp.
    o_ref[...] = (x * out_f * out_t).astype(o_ref.dtype)


def _tpu_vmem_budgets():
    """Generation-aware (scoped VMEM limit, block budget) in bytes."""
    cap = None
    try:
        cap = int(pltpu.get_tpu_info().vmem_capacity_bytes)
    except Exception:
        cap = None
    if cap is None:
        cap = 64 * 1024 * 1024                 # conservative default (v7x per-TC VMEM)
    if cap <= 64 * 1024 * 1024:                # v7x: 64 MiB per TensorCore
        scoped = 44 * 1024 * 1024
    else:                                      # v5e / v6e: 128 MiB physical VMEM
        scoped = 64 * 1024 * 1024
    block_budget = (scoped // 4) * 3           # ~0.75x of scoped limit for the 4 slabs
    return scoped, block_budget


def _is_multi_tensorcore_chip():
    """True on chips with >1 TensorCore per chip (v7x); v5e/v6e are single-TC."""
    try:
        kind = jax.devices()[0].device_kind.lower()
    except Exception:
        return False
    return "v7" in kind


def _choose_block_b(B, T, F, itemsize, block_budget, multi_core):
    """Largest batch-block whose 2-in + 2-out double-buffers fit the budget.
    Only on multi-TC chips do we keep >=2 grid steps for megacore sharding."""
    per_b = T * F * itemsize
    bblk = max(1, int(block_budget // (4 * per_b)))
    bblk = min(bblk, B)
    if multi_core and B >= 2:
        bblk = min(bblk, pl.cdiv(B, 2))        # >=2 parallel grid steps on v7x
    return max(bblk, 1)


def tf_attention(x, params, *, block_b=None):
    """x: (B, T, F) float32 or bfloat16; params: (2, 9) float32."""
    B, T, F = x.shape
    assert T >= 3 and F >= 3, "dilation-2 conv needs axis length >= 3"
    itemsize = jnp.dtype(x.dtype).itemsize

    scoped_vmem, block_budget = _tpu_vmem_budgets()
    if block_b is None:
        block_b = _choose_block_b(B, T, F, itemsize, block_budget,
                                  _is_multi_tensorcore_chip())
    bblk = min(int(block_b), B)
    grid = (pl.cdiv(B, bblk),)                 # last block padded if bblk does not divide B

    # T/F MUST stay full-extent inside each block (roll+mask convs and means span
    # the whole axis); only the batch axis is tiled.
    block_shape = (bblk, T, F)
    assert block_shape[1:] == (T, F)

    cost = pl.CostEstimate(
        flops=6 * B * T * F,                       # 2 means + fused scale (rough)
        transcendentals=B * (T + F),               # one exp per sigmoid element
        bytes_accessed=2 * B * T * F * itemsize + params.size * params.dtype.itemsize,
    )

    # TODO(synk): if F is far from a multiple of 128 (e.g. 257 STFT bins), carry a
    # lane-padded layout end-to-end in the surrounding model instead of pad/strip
    # around this call — a wrapper-side pad is its own full-tensor HBM pass.
    return pl.pallas_call(
        tf_attention_kernel,
        out_shape=jax.ShapeDtypeStruct((B, T, F), x.dtype),
        grid=grid,
        in_specs=[
            # (2, 9) parameter table lives in SMEM for the whole call.
            pl.BlockSpec(memory_space=pltpu.MemorySpace.SMEM),
            # One (bblk, T, F) batch slab per grid step; T/F full-extent.
            pl.BlockSpec(block_shape, lambda b: (b, 0, 0)),
        ],
        out_specs=pl.BlockSpec(block_shape, lambda b: (b, 0, 0)),
        compiler_params=pltpu.CompilerParams(
            dimension_semantics=("parallel",),
            vmem_limit_bytes=scoped_vmem,
        ),
        cost_estimate=cost,
    )(params, x)


def ref_forward(x, params):
    """Plain-JAX reference reproducing the PyTorch forward exactly (f32)."""
    def conv3(v, w0, w1, w2, b, dil):
        L = v.shape[-1]
        vp = jnp.pad(v, ((0, 0), (dil, dil)))
        return (w0 * vp[:, 0:L] + w1 * vp[:, dil:dil + L]
                + w2 * vp[:, 2 * dil:2 * dil + L] + b)

    def branch(v, row):
        p = params[row]
        h = conv3(v, p[0], p[1], p[2], p[3], 1)
        h = conv3(h, p[4], p[5], p[6], p[7], 2)
        h = jnp.where(h >= 0, h, p[8] * h)
        return 1.0 / (1.0 + jnp.exp(-h))

    out_t = branch(jnp.mean(x, axis=1), 0)          # (B, F)
    out_f = branch(jnp.mean(x, axis=2), 1)          # (B, T)
    attn = out_f[:, :, None] * out_t[:, None, :]    # (B, T, F)
    return x * attn


if __name__ == "__main__":
    # Deterministic parameters (Conv1d(1,1,3) weight+bias per conv, PReLU alpha=0.25
    # as in PyTorch's default init).
    params = jnp.array(
        [[0.20, -0.10, 0.30, 0.05, 0.10, 0.40, -0.20, -0.03, 0.25],   # t-path
         [-0.15, 0.25, 0.10, 0.02, 0.30, -0.05, 0.20, 0.01, 0.25]],   # f-path
        dtype=jnp.float32)

    # --- float32 I/O; block_b=2 with B=5 exercises a multi-step grid AND the
    #     cdiv-padded partial last batch block ---------------------------------
    B, T, F = 5, 16, 128
    x = jax.random.normal(jax.random.PRNGKey(0), (B, T, F), dtype=jnp.float32)
    out = tf_attention(x, params, block_b=2)        # grid = cdiv(5, 2) = 3
    jax.block_until_ready(out)
    ref = ref_forward(x, params)
    assert out.shape == ref.shape and out.dtype == ref.dtype
    max_err = float(jnp.max(jnp.abs(out - ref)))
    assert jnp.allclose(out, ref, atol=3e-5, rtol=1e-5), f"f32 max abs err = {max_err:e}"

    # --- bfloat16 HBM I/O (the ~2x memory-bandwidth lever); compute stays f32 ---
    xb = jax.random.normal(jax.random.PRNGKey(1), (4, 16, 128),
                           dtype=jnp.float32).astype(jnp.bfloat16)
    outb = tf_attention(xb, params)                 # auto block chooser
    jax.block_until_ready(outb)
    refb = ref_forward(xb.astype(jnp.float32), params)
    assert outb.dtype == jnp.bfloat16 and outb.shape == refb.shape
    max_err_b = float(jnp.max(jnp.abs(outb.astype(jnp.float32) - refb)))
    assert max_err_b < 5e-2, f"bf16 max abs err = {max_err_b:e}"

    print("KERNEL_OK")
</pallas_src>

<mosaic_0001>
module attributes {stable_mosaic.version = 11 : i64} {
  func.func @tf_attention_kernel(%arg0: i32, %arg1: memref<2x9xf32, #tpu.memory_space<smem>>, %arg2: memref<2x16x128xf32, #tpu.memory_space<vmem>>, %arg3: memref<2x16x128xf32, #tpu.memory_space<vmem>>) attributes {dimension_semantics = [#tpu.dimension_semantics<parallel>], iteration_bounds = array<i64: 3>, scalar_prefetch = 0 : i64, scratch_operands = 0 : i64, tpu.core_type = #tpu.core_type<tc>, window_params = [{transform_indices = @transform_0, window_bounds = array<i64: 2, 9>}, {transform_indices = @transform_1, window_bounds = array<i64: 2, 16, 128>}, {transform_indices = @transform_2, window_bounds = array<i64: 2, 16, 128>}]} {
    %c0 = arith.constant 0 : index
    %c0_0 = arith.constant 0 : index
    %c0_1 = arith.constant 0 : index
    %0 = vector.load %arg2[%c0, %c0_0, %c0_1] : memref<2x16x128xf32, #tpu.memory_space<vmem>>, vector<2x16x128xf32>
    %cst = arith.constant dense<0.000000e+00> : vector<2x128xf32>
    %1 = vector.multi_reduction <add>, %0, %cst [1] : vector<2x16x128xf32> to vector<2x128xf32>
    %2 = vector.shape_cast %1 : vector<2x128xf32> to vector<2x1x128xf32>
    %cst_2 = arith.constant 1.600000e+01 : f32
    %3 = vector.broadcast %cst_2 : f32 to vector<2x1x128xf32>
    %4 = arith.divf %2, %3 : vector<2x1x128xf32>
    %c0_3 = arith.constant 0 : index
    %c0_4 = arith.constant 0 : index
    %5 = memref.load %arg1[%c0_3, %c0_4] : memref<2x9xf32, #tpu.memory_space<smem>>
    %c0_5 = arith.constant 0 : index
    %c1 = arith.constant 1 : index
    %6 = memref.load %arg1[%c0_5, %c1] : memref<2x9xf32, #tpu.memory_space<smem>>
    %c0_6 = arith.constant 0 : index
    %c2 = arith.constant 2 : index
    %7 = memref.load %arg1[%c0_6, %c2] : memref<2x9xf32, #tpu.memory_space<smem>>
    %c0_7 = arith.constant 0 : index
    %c3 = arith.constant 3 : index
    %8 = memref.load %arg1[%c0_7, %c3] : memref<2x9xf32, #tpu.memory_space<smem>>
    %c0_8 = arith.constant 0 : index
    %c4 = arith.constant 4 : index
    %9 = memref.load %arg1[%c0_8, %c4] : memref<2x9xf32, #tpu.memory_space<smem>>
    %c0_9 = arith.constant 0 : index
    %c5 = arith.constant 5 : index
    %10 = memref.load %arg1[%c0_9, %c5] : memref<2x9xf32, #tpu.memory_space<smem>>
    %c0_10 = arith.constant 0 : index
    %c6 = arith.constant 6 : index
    %11 = memref.load %arg1[%c0_10, %c6] : memref<2x9xf32, #tpu.memory_space<smem>>
    %c0_11 = arith.constant 0 : index
    %c7 = arith.constant 7 : index
    %12 = memref.load %arg1[%c0_11, %c7] : memref<2x9xf32, #tpu.memory_space<smem>>
    %c0_12 = arith.constant 0 : index
    %c8 = arith.constant 8 : index
    %13 = memref.load %arg1[%c0_12, %c8] : memref<2x9xf32, #tpu.memory_space<smem>>
    %14 = tpu.iota {dimensions = array<i32: 2>} : vector<2x1x128xi32>
    %c1_i32 = arith.constant 1 : i32
    %15 = vector.broadcast %c1_i32 : i32 to vector<2x1x128xi32>
    %16 = arith.cmpi sge, %14, %15 : vector<2x1x128xi32>
    %c1_i32_13 = arith.constant 1 : i32
    %17 = tpu.dynamic_rotate %4 by %c1_i32_13 dim 2 : vector<2x1x128xf32>, i32 -> vector<2x1x128xf32>
    %cst_14 = arith.constant 0.000000e+00 : f32
    %18 = vector.broadcast %cst_14 : f32 to vector<2x1x128xf32>
    %19 = arith.select %16, %17, %18 : vector<2x1x128xi1>, vector<2x1x128xf32>
    %c127_i32 = arith.constant 127 : i32
    %20 = vector.broadcast %c127_i32 : i32 to vector<2x1x128xi32>
    %21 = arith.cmpi slt, %14, %20 : vector<2x1x128xi32>
    %c127_i32_15 = arith.constant 127 : i32
    %22 = tpu.dynamic_rotate %4 by %c127_i32_15 dim 2 : vector<2x1x128xf32>, i32 -> vector<2x1x128xf32>
    %cst_16 = arith.constant 0.000000e+00 : f32
    %23 = vector.broadcast %cst_16 : f32 to vector<2x1x128xf32>
    %24 = arith.select %21, %22, %23 : vector<2x1x128xi1>, vector<2x1x128xf32>
    %25 = vector.broadcast %5 : f32 to vector<2x1x128xf32>
    %26 = arith.mulf %25, %19 : vector<2x1x128xf32>
    %27 = vector.broadcast %6 : f32 to vector<2x1x128xf32>
    %28 = arith.mulf %27, %4 : vector<2x1x128xf32>
    %29 = arith.addf %26, %28 : vector<2x1x128xf32>
    %30 = vector.broadcast %7 : f32 to vector<2x1x128xf32>
    %31 = arith.mulf %30, %24 : vector<2x1x128xf32>
    %32 = arith.addf %29, %31 : vector<2x1x128xf32>
    %33 = vector.broadcast %8 : f32 to vector<2x1x128xf32>
    %34 = arith.addf %32, %33 : vector<2x1x128xf32>
    %c2_i32 = arith.constant 2 : i32
    %35 = vector.broadcast %c2_i32 : i32 to vector<2x1x128xi32>
    %36 = arith.cmpi sge, %14, %35 : vector<2x1x128xi32>
    %c2_i32_17 = arith.constant 2 : i32
    %37 = tpu.dynamic_rotate %34 by %c2_i32_17 dim 2 : vector<2x1x128xf32>, i32 -> vector<2x1x128xf32>
    %cst_18 = arith.constant 0.000000e+00 : f32
    %38 = vector.broadcast %cst_18 : f32 to vector<2x1x128xf32>
    %39 = arith.select %36, %37, %38 : vector<2x1x128xi1>, vector<2x1x128xf32>
    %c126_i32 = arith.constant 126 : i32
    %40 = vector.broadcast %c126_i32 : i32 to vector<2x1x128xi32>
    %41 = arith.cmpi slt, %14, %40 : vector<2x1x128xi32>
    %c126_i32_19 = arith.constant 126 : i32
    %42 = tpu.dynamic_rotate %34 by %c126_i32_19 dim 2 : vector<2x1x128xf32>, i32 -> vector<2x1x128xf32>
    %cst_20 = arith.constant 0.000000e+00 : f32
    %43 = vector.broadcast %cst_20 : f32 to vector<2x1x128xf32>
    %44 = arith.select %41, %42, %43 : vector<2x1x128xi1>, vector<2x1x128xf32>
    %45 = vector.broadcast %9 : f32 to vector<2x1x128xf32>
    %46 = arith.mulf %45, %39 : vector<2x1x128xf32>
    %47 = vector.broadcast %10 : f32 to vector<2x1x128xf32>
    %48 = arith.mulf %47, %34 : vector<2x1x128xf32>
    %49 = arith.addf %46, %48 : vector<2x1x128xf32>
    %50 = vector.broadcast %11 : f32 to vector<2x1x128xf32>
    %51 = arith.mulf %50, %44 : vector<2x1x128xf32>
    %52 = arith.addf %49, %51 : vector<2x1x128xf32>
    %53 = vector.broadcast %12 : f32 to vector<2x1x128xf32>
    %54 = arith.addf %52, %53 : vector<2x1x128xf32>
    %cst_21 = arith.constant 0.000000e+00 : f32
    %55 = vector.broadcast %cst_21 : f32 to vector<2x1x128xf32>
    %56 = arith.cmpf oge, %54, %55 : vector<2x1x128xf32>
    %57 = vector.broadcast %13 : f32 to vector<2x1x128xf32>
    %58 = arith.mulf %57, %54 : vector<2x1x128xf32>
    %59 = arith.select %56, %54, %58 : vector<2x1x128xi1>, vector<2x1x128xf32>
    %cst_22 = arith.constant 0.000000e+00 : f32
    %60 = vector.broadcast %cst_22 : f32 to vector<2x1x128xf32>
    %61 = arith.subf %60, %59 : vector<2x1x128xf32>
    %62 = math.exp %61 : vector<2x1x128xf32>
    %cst_23 = arith.constant 1.000000e+00 : f32
    %63 = vector.broadcast %cst_23 : f32 to vector<2x1x128xf32>
    %64 = arith.addf %63, %62 : vector<2x1x128xf32>
    %65 = tpu.reciprocal %64 : vector<2x1x128xf32> -> vector<2x1x128xf32>
    %cst_24 = arith.constant dense<0.000000e+00> : vector<2x16xf32>
    %66 = vector.multi_reduction <add>, %0, %cst_24 [2] : vector<2x16x128xf32> to vector<2x16xf32>
    %67 = vector.shape_cast %66 : vector<2x16xf32> to vector<2x16x1xf32>
    %cst_25 = arith.constant 1.280000e+02 : f32
    %68 = vector.broadcast %cst_25 : f32 to vector<2x16x1xf32>
    %69 = arith.divf %67, %68 : vector<2x16x1xf32>
    %c1_26 = arith.constant 1 : index
    %c0_27 = arith.constant 0 : index
    %70 = memref.load %arg1[%c1_26, %c0_27] : memref<2x9xf32, #tpu.memory_space<smem>>
    %c1_28 = arith.constant 1 : index
    %c1_29 = arith.constant 1 : index
    %71 = memref.load %arg1[%c1_28, %c1_29] : memref<2x9xf32, #tpu.memory_space<smem>>
    %c1_30 = arith.constant 1 : index
    %c2_31 = arith.constant 2 : index
    %72 = memref.load %arg1[%c1_30, %c2_31] : memref<2x9xf32, #tpu.memory_space<smem>>
    %c1_32 = arith.constant 1 : index
    %c3_33 = arith.constant 3 : index
    %73 = memref.load %arg1[%c1_32, %c3_33] : memref<2x9xf32, #tpu.memory_space<smem>>
    %c1_34 = arith.constant 1 : index
    %c4_35 = arith.constant 4 : index
    %74 = memref.load %arg1[%c1_34, %c4_35] : memref<2x9xf32, #tpu.memory_space<smem>>
    %c1_36 = arith.constant 1 : index
    %c5_37 = arith.constant 5 : index
    %75 = memref.load %arg1[%c1_36, %c5_37] : memref<2x9xf32, #tpu.memory_space<smem>>
    %c1_38 = arith.constant 1 : index
    %c6_39 = arith.constant 6 : index
    %76 = memref.load %arg1[%c1_38, %c6_39] : memref<2x9xf32, #tpu.memory_space<smem>>
    %c1_40 = arith.constant 1 : index
    %c7_41 = arith.constant 7 : index
    %77 = memref.load %arg1[%c1_40, %c7_41] : memref<2x9xf32, #tpu.memory_space<smem>>
    %c1_42 = arith.constant 1 : index
    %c8_43 = arith.constant 8 : index
    %78 = memref.load %arg1[%c1_42, %c8_43] : memref<2x9xf32, #tpu.memory_space<smem>>
    %79 = tpu.iota {dimensions = array<i32: 1>} : vector<2x16x1xi32>
    %c1_i32_44 = arith.constant 1 : i32
    %80 = vector.broadcast %c1_i32_44 : i32 to vector<2x16x1xi32>
    %81 = arith.cmpi sge, %79, %80 : vector<2x16x1xi32>
    %c1_i32_45 = arith.constant 1 : i32
    %82 = tpu.dynamic_rotate %69 by %c1_i32_45 dim 1 : vector<2x16x1xf32>, i32 -> vector<2x16x1xf32>
    %cst_46 = arith.constant 0.000000e+00 : f32
    %83 = vector.broadcast %cst_46 : f32 to vector<2x16x1xf32>
    %84 = arith.select %81, %82, %83 : vector<2x16x1xi1>, vector<2x16x1xf32>
    %c15_i32 = arith.constant 15 : i32
    %85 = vector.broadcast %c15_i32 : i32 to vector<2x16x1xi32>
    %86 = arith.cmpi slt, %79, %85 : vector<2x16x1xi32>
    %c15_i32_47 = arith.constant 15 : i32
    %87 = tpu.dynamic_rotate %69 by %c15_i32_47 dim 1 : vector<2x16x1xf32>, i32 -> vector<2x16x1xf32>
    %cst_48 = arith.constant 0.000000e+00 : f32
    %88 = vector.broadcast %cst_48 : f32 to vector<2x16x1xf32>
    %89 = arith.select %86, %87, %88 : vector<2x16x1xi1>, vector<2x16x1xf32>
    %90 = vector.broadcast %70 : f32 to vector<2x16x1xf32>
    %91 = arith.mulf %90, %84 : vector<2x16x1xf32>
    %92 = vector.broadcast %71 : f32 to vector<2x16x1xf32>
    %93 = arith.mulf %92, %69 : vector<2x16x1xf32>
    %94 = arith.addf %91, %93 : vector<2x16x1xf32>
    %95 = vector.broadcast %72 : f32 to vector<2x16x1xf32>
    %96 = arith.mulf %95, %89 : vector<2x16x1xf32>
    %97 = arith.addf %94, %96 : vector<2x16x1xf32>
    %98 = vector.broadcast %73 : f32 to vector<2x16x1xf32>
    %99 = arith.addf %97, %98 : vector<2x16x1xf32>
    %c2_i32_49 = arith.constant 2 : i32
    %100 = vector.broadcast %c2_i32_49 : i32 to vector<2x16x1xi32>
    %101 = arith.cmpi sge, %79, %100 : vector<2x16x1xi32>
    %c2_i32_50 = arith.constant 2 : i32
    %102 = tpu.dynamic_rotate %99 by %c2_i32_50 dim 1 : vector<2x16x1xf32>, i32 -> vector<2x16x1xf32>
    %cst_51 = arith.constant 0.000000e+00 : f32
    %103 = vector.broadcast %cst_51 : f32 to vector<2x16x1xf32>
    %104 = arith.select %101, %102, %103 : vector<2x16x1xi1>, vector<2x16x1xf32>
    %c14_i32 = arith.constant 14 : i32
    %105 = vector.broadcast %c14_i32 : i32 to vector<2x16x1xi32>
    %106 = arith.cmpi slt, %79, %105 : vector<2x16x1xi32>
    %c14_i32_52 = arith.constant 14 : i32
    %107 = tpu.dynamic_rotate %99 by %c14_i32_52 dim 1 : vector<2x16x1xf32>, i32 -> vector<2x16x1xf32>
    %cst_53 = arith.constant 0.000000e+00 : f32
    %108 = vector.broadcast %cst_53 : f32 to vector<2x16x1xf32>
    %109 = arith.select %106, %107, %108 : vector<2x16x1xi1>, vector<2x16x1xf32>
    %110 = vector.broadcast %74 : f32 to vector<2x16x1xf32>
    %111 = arith.mulf %110, %104 : vector<2x16x1xf32>
    %112 = vector.broadcast %75 : f32 to vector<2x16x1xf32>
    %113 = arith.mulf %112, %99 : vector<2x16x1xf32>
    %114 = arith.addf %111, %113 : vector<2x16x1xf32>
    %115 = vector.broadcast %76 : f32 to vector<2x16x1xf32>
    %116 = arith.mulf %115, %109 : vector<2x16x1xf32>
    %117 = arith.addf %114, %116 : vector<2x16x1xf32>
    %118 = vector.broadcast %77 : f32 to vector<2x16x1xf32>
    %119 = arith.addf %117, %118 : vector<2x16x1xf32>
    %cst_54 = arith.constant 0.000000e+00 : f32
    %120 = vector.broadcast %cst_54 : f32 to vector<2x16x1xf32>
    %121 = arith.cmpf oge, %119, %120 : vector<2x16x1xf32>
    %122 = vector.broadcast %78 : f32 to vector<2x16x1xf32>
    %123 = arith.mulf %122, %119 : vector<2x16x1xf32>
    %124 = arith.select %121, %119, %123 : vector<2x16x1xi1>, vector<2x16x1xf32>
    %cst_55 = arith.constant 0.000000e+00 : f32
    %125 = vector.broadcast %cst_55 : f32 to vector<2x16x1xf32>
    %126 = arith.subf %125, %124 : vector<2x16x1xf32>
    %127 = math.exp %126 : vector<2x16x1xf32>
    %cst_56 = arith.constant 1.000000e+00 : f32
    %128 = vector.broadcast %cst_56 : f32 to vector<2x16x1xf32>
    %129 = arith.addf %128, %127 : vector<2x16x1xf32>
    %130 = tpu.reciprocal %129 : vector<2x16x1xf32> -> vector<2x16x1xf32>
    %131 = vector.broadcast %130 : vector<2x16x1xf32> to vector<2x16x128xf32>
    %132 = arith.mulf %0, %131 : vector<2x16x128xf32>
    %133 = vector.broadcast %65 : vector<2x1x128xf32> to vector<2x16x128xf32>
    %134 = arith.mulf %132, %133 : vector<2x16x128xf32>
    %c0_57 = arith.constant 0 : index
    %c0_58 = arith.constant 0 : index
    %c0_59 = arith.constant 0 : index
    %135 = vector.load %arg3[%c0_57, %c0_58, %c0_59] : memref<2x16x128xf32, #tpu.memory_space<vmem>>, vector<2x16x128xf32>
    tpu.vector_store %arg3[%c0_57, %c0_58, %c0_59], %134 {strides = array<i32>} : memref<2x16x128xf32, #tpu.memory_space<vmem>>, vector<2x16x128xf32>,
    return
  }
  func.func @transform_0(%arg0: i32) -> (i32, i32) {
    %c0_i32 = arith.constant 0 : i32
    %c0_i32_0 = arith.constant 0 : i32
    %c0_i32_1 = arith.constant 0 : i32
    return %c0_i32, %c0_i32_0 : i32, i32
  }
  func.func @transform_1(%arg0: i32) -> (i32, i32, i32) {
    %c0_i32 = arith.constant 0 : i32
    %c0_i32_0 = arith.constant 0 : i32
    %c0_i32_1 = arith.constant 0 : i32
    return %arg0, %c0_i32, %c0_i32_0 : i32, i32, i32
  }
  func.func @transform_2(%arg0: i32) -> (i32, i32, i32) {
    %c0_i32 = arith.constant 0 : i32
    %c0_i32_0 = arith.constant 0 : i32
    %c0_i32_1 = arith.constant 0 : i32
    return %arg0, %c0_i32, %c0_i32_0 : i32, i32, i32
  }
}

</mosaic_0001>

<llo_original>
// kernel: tpu_custom_call.1
$region0: #{tpu_custom_call.1}
  #allocation0 [shape = 'u32[]', space=smem, size = 0x4, offset = 0x4, fixed_abs, tag = 'smem constant byte address 0x4 - core index']
  #allocation1 [shape = 'u32[144,128]{1,0:T(1,128)}', space=vmem, size = 0x12000, scoped, tag = 'internal scratch']
  %s0 = inlined_call_operand.hbm [shape: f32[2,9], index: 0, kind: input, shape index: {}]
  %s1 = inlined_call_operand.hbm [shape: f32[5,16,128], index: 1, kind: input, shape index: {}]
  %s2 = inlined_call_operand.hbm [shape: f32[5,16,128], index: 2, kind: output, shape index: {}]
  %s3 = sld [smem:[#allocation0]]
  $region49: #{tpu_custom_call.1} parent=0
    _
  %s5 = ssub.s32 1, %s3
  %s6 = scalar_select 0, %s5, %s3
  $region1: #{tpu_custom_call.1} parent=0
    #allocation2 [shape = 'u8[1024]{0}', space=smem, size = 0x400, scoped, tag = 'input window, operand 0, single buffered']
    #allocation3 [shape = 's32[2]{0}', space=sflag, size = 0x8, scoped, tag = 'scoped memory for tpu_custom_call.1']
    #allocation4 [shape = 's32[2]{0}', space=sflag, size = 0x8, scoped, tag = 'scoped memory for tpu_custom_call.1']
    #allocation5 [shape = 's32[2]{0}', space=sflag, size = 0x8, scoped, tag = 'scoped memory for tpu_custom_call.1']
    #allocation6 [shape = 'u8[32768]{0}', space=vmem, size = 0x8000, scoped, tag = 'input window, operand 1']
    #allocation7 [shape = 'u8[32768]{0}', space=vmem, size = 0x8000, scoped, tag = 'output window, operand 0']
    %7 = vsyncpa [#allocation5], 0
    %8 = vsyncpa [#allocation3], 0
    %s9 = scalar_lea.sflag [#allocation3], 1
    %10 = vsyncpa %s9, 0
    %11 = vsyncpa [#allocation4], 0
    %s12 = scalar_lea.sflag [#allocation4], 1
    %13 = vsyncpa %s12, 0
    loop: start=0, step=1, limit=5
    $region2: #{tpu_custom_call.1} parent=1 // loop_pre_header
      _
    $region3: #{tpu_custom_call.1} parent=1 // loop_header
      %s15 = sphi 0, %s19
      %p16 = scmp.ge.s32.totalorder %s15, 5
      %s23 = sphi 0, %s23
      %s25 = sphi 0, %s23
      %s26 = sphi 0, %s25
      %s40 = sphi 0, %s26
      %s46 = sphi 0, %s48
      %s49 = sphi 0, %s46
      %s50 = sphi 0, %s49
      %s66 = sphi 0, %s50
      %s72 = sphi 0, %s74
      %s75 = sphi 0, %s72
      %s76 = sphi 0, %s75
      %s92 = sphi 0, %s76
    $region4: #{tpu_custom_call.1} parent=1 // loop_header_branch
      %18 = sbr.rel (%p16) target = $region8
    $region5: #{tpu_custom_call.1} parent=1 // loop_body
      %s20 = ssub.s32 %s15, 1
      %s21 = ssub.s32 %s15, 2
      %s22 = sadd.s32 %s15, 1
      %s24 = sadd.s32 %s23, 1
      %p27 = scmp.eq.s32.totalorder %s15, 2
      %p28 = scmp.ne.s32.totalorder %s23, %s25
      %p29 = scmp.eq.s32.totalorder %s15, 0
      %p30 = por %p28, %p29
      %p31 = scmp.ne.s32.totalorder %s23, %s25
      %p32 = scmp.eq.s32.totalorder %s20, 2
      %p33 = por %p31, %p32
      %p34 = scmp.ne.s32.totalorder %s25, %s26
      %p35 = scmp.eq.s32.totalorder %s20, 0
      %p36 = por %p34, %p35
      %p37 = scmp.ne.s32.totalorder %s25, %s26
      %p38 = scmp.eq.s32.totalorder %s21, 2
      %p39 = por %p37, %p38
      %p41 = scmp.ne.s32.totalorder %s26, %s40
      %p42 = scmp.eq.s32.totalorder %s21, 0
      %p43 = por %p41, %p42
      %s44 = ssub.s32 %s15, %s22
      %p45 = scmp.eq.s32.totalorder %s44, 0
      %s47 = sadd.s32 %s46, 1
      %s48 = scalar_select %p45, %s46, %s47
      %p51 = pneg %p45
      %p52 = scmp.eq.s32.totalorder %s15, 2
      %p53 = por %p51, %p52
      %p54 = scmp.ne.s32.totalorder %s46, %s49
      %p55 = scmp.eq.s32.totalorder %s15, 0
      %p56 = por %p54, %p55
      %p57 = scmp.ne.s32.totalorder %s46, %s49
      %p58 = scmp.eq.s32.totalorder %s20, 2
      %p59 = por %p57, %p58
      %p60 = scmp.ne.s32.totalorder %s49, %s50
      %p61 = scmp.eq.s32.totalorder %s20, 0
      %p62 = por %p60, %p61
      %p63 = scmp.ne.s32.totalorder %s49, %s50
      %p64 = scmp.eq.s32.totalorder %s21, 2
      %p65 = por %p63, %p64
      %p67 = scmp.ne.s32.totalorder %s50, %s66
      %p68 = scmp.eq.s32.totalorder %s21, 0
      %p69 = por %p67, %p68
      %s70 = ssub.s32 %s15, %s22
      %p71 = scmp.eq.s32.totalorder %s70, 0
      %s73 = sadd.s32 %s72, 1
      %s74 = scalar_select %p71, %s72, %s73
      %p77 = pneg %p71
      %p78 = scmp.eq.s32.totalorder %s15, 2
      %p79 = por %p77, %p78
      %p80 = scmp.ne.s32.totalorder %s72, %s75
      %p81 = scmp.eq.s32.totalorder %s15, 0
      %p82 = por %p80, %p81
      %p83 = scmp.ne.s32.totalorder %s72, %s75
      %p84 = scmp.eq.s32.totalorder %s20, 2
      %p85 = por %p83, %p84
      %p86 = scmp.ne.s32.totalorder %s75, %s76
      %p87 = scmp.eq.s32.totalorder %s20, 0
      %p88 = por %p86, %p87
      %p89 = scmp.ne.s32.totalorder %s75, %s76
      %p90 = scmp.eq.s32.totalorder %s21, 2
      %p91 = por %p89, %p90
      %p93 = scmp.ne.s32.totalorder %s76, %s92
      %p94 = scmp.eq.s32.totalorder %s21, 0
      %p95 = por %p93, %p94
      %p96 = scmp.le.s32.totalorder 1, %s15
      %p97 = scmp.lt.s32.totalorder %s15, 4
      %p98 = pnand %p96, %p97
      %p99 = pneg %p98
      // Predicated region
      $region9: #{tpu_custom_call.1} parent=5 // pred_check
        _
      $region10: #{tpu_custom_call.1} parent=5 // pred_check_branch
        %101 = sbr.rel (%p98) target = $region12
      $region11: #{tpu_custom_call.1} parent=5 // pred_region
        %s102 = ssub.s32 %s15, 1
        // Predicated region
        $region13: #{tpu_custom_call.1} parent=11 // pred_check
          %p103 = pneg %p36
        $region14: #{tpu_custom_call.1} parent=11 // pred_check_branch
          %105 = sbr.rel (%p103) target = $region16
        $region15: #{tpu_custom_call.1} parent=11 // pred_region
          %s107 = ssub.s32 32, 32
          %108 = vsyncadd [#allocation5], %s107
          %111 = dma.hbm_to_smem %s0, 32, [#allocation2], [#allocation5]
        $region16: #{tpu_custom_call.1} parent=11 // pred_fallthru
          _
      $region12: #{tpu_custom_call.1} parent=5 // pred_fallthru
        _
      %p112 = scmp.lt.s32.totalorder %s15, 3
      // Predicated region
      $region17: #{tpu_custom_call.1} parent=5 // pred_check
        %p113 = pneg %p112
      $region18: #{tpu_custom_call.1} parent=5 // pred_check_branch
        %115 = sbr.rel (%p113) target = $region20
      $region19: #{tpu_custom_call.1} parent=5 // pred_region
        // Predicated region
        $region21: #{tpu_custom_call.1} parent=19 // pred_check
          %p116 = pneg %p56
        $region22: #{tpu_custom_call.1} parent=19 // pred_check_branch
          %118 = sbr.rel (%p116) target = $region24
        $region23: #{tpu_custom_call.1} parent=19 // pred_region
          %s119 = sand.u32 %s46, 1
          %s120 = scalar_lea.sflag [#allocation3], %s119
          %s121 = sand.u32 %s46, 1
          %s122 = smul.addr %s121, 32
          %s123 = scalar_lea.vmem [#allocation6], %s122
          %s124 = smul.u32 2, %s15
          %s125 = ssub.s32 5, %s124
          %p126 = scmp.lt.s32.totalorder %s125, 2
          %s127 = scalar_select %p126, %s125, 2
          %s128 = smul.u32 128, %s127
          %s129 = smul.u32 %s128, 2
          %s131 = ssub.s32 512, %s129
          %132 = vsyncadd %s120, %s131
          %p133 = scmp.ne.s32.totalorder 0, %s129
          %s134 = smul.addr %s124, 2
          %s135 = smul.addr %s134, 128
          %s136 = scalar_lea.hbm %s1, %s135
          %s137 = smul.u32 %s127, 2
          %s138 = smul.u32 8, %s137
          %s139 = sshll.u32 %s123, 4
          %s140 = int_to_ptr.vmem [resolvable:$true] %s139
          %s141 = sshll.u32 %s138, 4
          %145 = dma.hbm_to_vmem [thread:$0]  (%p133), %s136, %s141, %s140, %s120, 128, 128, 8
        $region24: #{tpu_custom_call.1} parent=19 // pred_fallthru
          _
      $region20: #{tpu_custom_call.1} parent=5 // pred_fallthru
        _
      %p146 = scmp.le.s32.totalorder 1, %s15
      %p147 = scmp.lt.s32.totalorder %s15, 4
      %p148 = pnand %p146, %p147
      %p149 = pneg %p148
      // Predicated region
      $region25: #{tpu_custom_call.1} parent=5 // pred_check
        _
      $region26: #{tpu_custom_call.1} parent=5 // pred_check_branch
        %151 = sbr.rel (%p148) target = $region28
      $region27: #{tpu_custom_call.1} parent=5 // pred_region
        %s152 = ssub.s32 %s15, 1
        // Predicated region
        $region29: #{tpu_custom_call.1} parent=27 // pred_check
          %p153 = pneg %p36
        $region30: #{tpu_custom_call.1} parent=27 // pred_check_branch
          %155 = sbr.rel (%p153) target = $region32
        $region31: #{tpu_custom_call.1} parent=27 // pred_region
          %156 = dma.done [#allocation5], 32
        $region32: #{tpu_custom_call.1} parent=27 // pred_fallthru
          _
        %s157 = sand.u32 %s49, 1
        %s158 = scalar_lea.sflag [#allocation3], %s157
        %s159 = sand.u32 %s49, 1
        %s160 = smul.addr %s159, 32
        %s161 = scalar_lea.vmem [#allocation6], %s160
        // Predicated region
        $region33: #{tpu_custom_call.1} parent=27 // pred_check
          %p162 = pneg %p62
        $region34: #{tpu_custom_call.1} parent=27 // pred_check_branch
          %164 = sbr.rel (%p162) target = $region36
        $region35: #{tpu_custom_call.1} parent=27 // pred_region
          %165 = dma.done %s158, 512
        $region36: #{tpu_custom_call.1} parent=27 // pred_fallthru
          _
        %166 = sfence
        %p167 = pneg %p36
        %p168 = pneg %p33
        %s169 = sand.u32 %s49, 1
        %s170 = scalar_lea.sflag [#allocation3], %s169
        %s171 = sand.u32 %s49, 1
        %s172 = smul.addr %s171, 32
        %s173 = scalar_lea.vmem [#allocation6], %s172
        %p174 = pneg %p62
        %p175 = pneg %p59
        %p176 = pneg %p88
        %p177 = pneg %p85
        %s178 = sand.u32 %s75, 1
        %s179 = scalar_lea.sflag [#allocation4], %s178
        %s180 = sand.u32 %s75, 1
        %s181 = smul.addr %s180, 32
        %s182 = scalar_lea.vmem [#allocation7], %s181
        %s183 = smul.u32 2, %s20
        %s184 = ssub.s32 5, %s183
        %p185 = scmp.lt.s32.totalorder %s184, 2
        %s186 = scalar_select %p185, %s184, 2
        %s187 = smul.u32 128, %s186
        %s188 = smul.u32 %s187, 2
        %s189 = smul.u32 2, %s20
        %s190 = ssub.s32 5, %s189
        %p191 = scmp.lt.s32.totalorder %s190, 2
        %s192 = scalar_select %p191, %s190, 2
        %s193 = smul.u32 128, %s192
        %s194 = smul.u32 %s193, 2
        %v195 = vld [vmem:[%s161] sm:$0xff]
        %v196 = vld [vmem:[%s161 + $0x8] sm:$0xff]
        %v197 = vld [vmem:[%s161 + $0x10] sm:$0xff]
        %v198 = vld [vmem:[%s161 + $0x18] sm:$0xff]
        %v199 = vadd.f32 %v195, %v196
        %v200 = vrot.slane %v199, 4
        %v201 = vadd.f32 %v199, %v200
        %v202 = vrot.slane %v201, 2
        %v203 = vadd.f32 %v201, %v202
        %v204 = vrot.slane %v203, 1
        %v205 = vadd.f32 %v203, %v204
        %v206 = vadd.f32 %v197, %v198
        %v207 = vrot.slane %v206, 4
        %v208 = vadd.f32 %v206, %v207
        %v209 = vrot.slane %v208, 2
        %v210 = vadd.f32 %v208, %v209
        %v211 = vrot.slane %v210, 1
        %v212 = vadd.f32 %v210, %v211
        %v213 = vrcp.pop 16.0
        %v214 = vmul.f32 %v205, %v213
        %v215 = vmul.f32 %v212, %v213
        %s216 = sld [smem:[#allocation2]]
        %s217 = sld [smem:[#allocation2 + $0x1]]
        %s218 = sld [smem:[#allocation2 + $0x2]]
        %s219 = sld [smem:[#allocation2 + $0x3]]
        %s220 = sld [smem:[#allocation2 + $0x4]]
        %s221 = sld [smem:[#allocation2 + $0x5]]
        %s222 = sld [smem:[#allocation2 + $0x6]]
        %s223 = sld [smem:[#allocation2 + $0x7]]
        %s224 = sld [smem:[#allocation2 + $0x8]]
        %v225 = vlaneseq
        %v226 = vand.u32 %v225, 127
        %vm227 = vcmp.ge.s32.totalorder %v226, 1
        %228 = vrot.lane.b32.xlu0 %v214, 1
        %v229 = vpop.permute.xlu0 %228
        %230 = vrot.lane.b32.xlu0 %v215, 1
        %v231 = vpop.permute.xlu0 %230
        %v232 = vsel %vm227, %v229, 0.0
        %v233 = vsel %vm227, %v231, 0.0
        %vm234 = vcmp.lt.s32.totalorder %v226, 127
        %235 = vrot.lane.b32.xlu0 %v214, 127
        %v236 = vpop.permute.xlu0 %235
        %237 = vrot.lane.b32.xlu0 %v215, 127
        %v238 = vpop.permute.xlu0 %237
        %v239 = vsel %vm234, %v236, 0.0
        %v240 = vsel %vm234, %v238, 0.0
        %v241 = vstv %s216
        %v242 = vmul.f32 %v241, %v232
        %v243 = vmul.f32 %v241, %v233
        %v244 = vstv %s217
        %v245 = vmul.f32 %v244, %v214
        %v246 = vmul.f32 %v244, %v215
        %v247 = vadd.f32 %v242, %v245
        %v248 = vadd.f32 %v243, %v246
        %v249 = vstv %s218
        %v250 = vmul.f32 %v249, %v239
        %v251 = vmul.f32 %v249, %v240
        %v252 = vadd.f32 %v247, %v250
        %v253 = vadd.f32 %v248, %v251
        %v254 = vstv %s219
        %v255 = vadd.f32 %v252, %v254
        %v256 = vadd.f32 %v253, %v254
        %vm257 = vcmp.ge.s32.totalorder %v226, 2
        %258 = vrot.lane.b32.xlu0 %v255, 2
        %v259 = vpop.permute.xlu0 %258
        %260 = vrot.lane.b32.xlu0 %v256, 2
        %v261 = vpop.permute.xlu0 %260
        %v262 = vsel %vm257, %v259, 0.0
        %v263 = vsel %vm257, %v261, 0.0
        %vm264 = vcmp.lt.s32.totalorder %v226, 126
        %265 = vrot.lane.b32.xlu0 %v255, 126
        %v266 = vpop.permute.xlu0 %265
        %267 = vrot.lane.b32.xlu0 %v256, 126
        %v268 = vpop.permute.xlu0 %267
        %v269 = vsel %vm264, %v266, 0.0
        %v270 = vsel %vm264, %v268, 0.0
        %v271 = vstv %s220
        %v272 = vmul.f32 %v271, %v262
        %v273 = vmul.f32 %v271, %v263
        %v274 = vstv %s221
        %v275 = vmul.f32 %v274, %v255
        %v276 = vmul.f32 %v274, %v256
        %v277 = vadd.f32 %v272, %v275
        %v278 = vadd.f32 %v273, %v276
        %v279 = vstv %s222
        %v280 = vmul.f32 %v279, %v269
        %v281 = vmul.f32 %v279, %v270
        %v282 = vadd.f32 %v277, %v280
        %v283 = vadd.f32 %v278, %v281
        %v284 = vstv %s223
        %v285 = vadd.f32 %v282, %v284
        %v286 = vadd.f32 %v283, %v284
        %vm287 = vcmp.ge.f32.partialorder %v285, 0.0
        %vm288 = vcmp.ge.f32.partialorder %v286, 0.0
        %v289 = vstv %s224
        %v290 = vmul.f32 %v289, %v285
        %v291 = vmul.f32 %v289, %v286
        %v292 = vsel %vm287, %v285, %v290
        %v293 = vsel %vm288, %v286, %v291
        %v294 = vsub.f32 0.0, %v292
        %v295 = vsub.f32 0.0, %v293
        %v296 = vmul.f32 %v294, 1.442695
        %v297 = vpow.pop %v296
        %v298 = vmul.f32 %v295, 1.442695
        %v299 = vpow.pop %v298
        %v300 = vadd.f32 %v297, 1.0
        %v301 = vadd.f32 %v299, 1.0
        %v302 = vrcp.pop %v300
        %v303 = vrcp.pop %v301
        %304 = vadd.xlane.f32.xlu0 %v195
        %v305 = vpop.xlane.xlu0 %304
        %306 = vadd.xlane.f32.xlu0 %v196
        %v307 = vpop.xlane.xlu0 %306
        %308 = vadd.xlane.f32.xlu0 %v197
        %v309 = vpop.xlane.xlu0 %308
        %310 = vadd.xlane.f32.xlu0 %v198
        %v311 = vpop.xlane.xlu0 %310
        %v312 = vrcp.pop 128.0
        %v313 = vmul.f32 %v305, %v312
        %v314 = vmul.f32 %v307, %v312
        %v315 = vmul.f32 %v309, %v312
        %v316 = vmul.f32 %v311, %v312
        %s317 = sld [smem:[#allocation2 + $0x80]]
        %s318 = sld [smem:[#allocation2 + $0x81]]
        %s319 = sld [smem:[#allocation2 + $0x82]]
        %s320 = sld [smem:[#allocation2 + $0x83]]
        %s321 = sld [smem:[#allocation2 + $0x84]]
        %s322 = sld [smem:[#allocation2 + $0x85]]
        %s323 = sld [smem:[#allocation2 + $0x86]]
        %s324 = sld [smem:[#allocation2 + $0x87]]
        %s325 = sld [smem:[#allocation2 + $0x88]]
        %v326 = vlaneseq
        %v327 = vshrl.u32 %v326, 7
        %v328 = vadd.s32 %v327, 8
        %vm329 = vcmp.ge.s32.totalorder %v327, 1
        %vm330 = vcmp.ge.s32.totalorder %v328, 1
        %v331 = vrot.slane %v313, 7
        %v332 = vrot.slane %v315, 7
        %v333 = vrot.slane %v314, 7
        %v334 = vrot.slane %v316, 7
        %vm335 = vcmp.lt.s32.totalorder %v327, 1
        %v336 = vsel %vm335, %v331, %v333
        %v337 = vsel %vm335, %v332, %v334
        %v338 = vsel %vm335, %v333, %v331
        %v339 = vsel %vm335, %v334, %v332
        %v340 = vsel %vm329, %v338, 0.0
        %v341 = vsel %vm330, %v336, 0.0
        %v342 = vsel %vm329, %v339, 0.0
        %v343 = vsel %vm330, %v337, 0.0
        %vm344 = vcmp.lt.s32.totalorder %v327, 15
        %vm345 = vcmp.lt.s32.totalorder %v328, 15
        %v346 = vrot.slane %v313, 1
        %v347 = vrot.slane %v315, 1
        %v348 = vrot.slane %v314, 1
        %v349 = vrot.slane %v316, 1
        %vm350 = vcmp.lt.s32.totalorder %v327, 7
        %v351 = vsel %vm350, %v346, %v348
        %v352 = vsel %vm350, %v347, %v349
        %v353 = vsel %vm350, %v348, %v346
        %v354 = vsel %vm350, %v349, %v347
        %v355 = vsel %vm344, %v351, 0.0
        %v356 = vsel %vm345, %v353, 0.0
        %v357 = vsel %vm344, %v352, 0.0
        %v358 = vsel %vm345, %v354, 0.0
        %v359 = vstv %s317
        %v360 = vmul.f32 %v359, %v340
        %v361 = vmul.f32 %v359, %v341
        %v362 = vmul.f32 %v359, %v342
        %v363 = vmul.f32 %v359, %v343
        %v364 = vstv %s318
        %v365 = vmul.f32 %v364, %v313
        %v366 = vmul.f32 %v364, %v314
        %v367 = vmul.f32 %v364, %v315
        %v368 = vmul.f32 %v364, %v316
        %v369 = vadd.f32 %v360, %v365
        %v370 = vadd.f32 %v361, %v366
        %v371 = vadd.f32 %v362, %v367
        %v372 = vadd.f32 %v363, %v368
        %v373 = vstv %s319
        %v374 = vmul.f32 %v373, %v355
        %v375 = vmul.f32 %v373, %v356
        %v376 = vmul.f32 %v373, %v357
        %v377 = vmul.f32 %v373, %v358
        %v378 = vadd.f32 %v369, %v374
        %v379 = vadd.f32 %v370, %v375
        %v380 = vadd.f32 %v371, %v376
        %v381 = vadd.f32 %v372, %v377
        %v382 = vstv %s320
        %v383 = vadd.f32 %v378, %v382
        %v384 = vadd.f32 %v379, %v382
        %v385 = vadd.f32 %v380, %v382
        %v386 = vadd.f32 %v381, %v382
        %vm387 = vcmp.ge.s32.totalorder %v327, 2
        %vm388 = vcmp.ge.s32.totalorder %v328, 2
        %v389 = vrot.slane %v383, 6
        %v390 = vrot.slane %v385, 6
        %v391 = vrot.slane %v384, 6
        %v392 = vrot.slane %v386, 6
        %vm393 = vcmp.lt.s32.totalorder %v327, 2
        %v394 = vsel %vm393, %v389, %v391
        %v395 = vsel %vm393, %v390, %v392
        %v396 = vsel %vm393, %v391, %v389
        %v397 = vsel %vm393, %v392, %v390
        %v398 = vsel %vm387, %v396, 0.0
        %v399 = vsel %vm388, %v394, 0.0
        %v400 = vsel %vm387, %v397, 0.0
        %v401 = vsel %vm388, %v395, 0.0
        %vm402 = vcmp.lt.s32.totalorder %v327, 14
        %vm403 = vcmp.lt.s32.totalorder %v328, 14
        %v404 = vrot.slane %v383, 2
        %v405 = vrot.slane %v385, 2
        %v406 = vrot.slane %v384, 2
        %v407 = vrot.slane %v386, 2
        %vm408 = vcmp.lt.s32.totalorder %v327, 6
        %v409 = vsel %vm408, %v404, %v406
        %v410 = vsel %vm408, %v405, %v407
        %v411 = vsel %vm408, %v406, %v404
        %v412 = vsel %vm408, %v407, %v405
        %v413 = vsel %vm402, %v409, 0.0
        %v414 = vsel %vm403, %v411, 0.0
        %v415 = vsel %vm402, %v410, 0.0
        %v416 = vsel %vm403, %v412, 0.0
        %v417 = vstv %s321
        %v418 = vmul.f32 %v417, %v398
        %v419 = vmul.f32 %v417, %v399
        %v420 = vmul.f32 %v417, %v400
        %v421 = vmul.f32 %v417, %v401
        %v422 = vstv %s322
        %v423 = vmul.f32 %v422, %v383
        %v424 = vmul.f32 %v422, %v384
        %v425 = vmul.f32 %v422, %v385
        %v426 = vmul.f32 %v422, %v386
        %v427 = vadd.f32 %v418, %v423
        %v428 = vadd.f32 %v419, %v424
        %v429 = vadd.f32 %v420, %v425
        %v430 = vadd.f32 %v421, %v426
        %v431 = vstv %s323
        %v432 = vmul.f32 %v431, %v413
        %v433 = vmul.f32 %v431, %v414
        %v434 = vmul.f32 %v431, %v415
        %v435 = vmul.f32 %v431, %v416
        %v436 = vadd.f32 %v427, %v432
        %v437 = vadd.f32 %v428, %v433
        %v438 = vadd.f32 %v429, %v434
        %v439 = vadd.f32 %v430, %v435
        %v440 = vstv %s324
        %v441 = vadd.f32 %v436, %v440
        %v442 = vadd.f32 %v437, %v440
        %v443 = vadd.f32 %v438, %v440
        %v444 = vadd.f32 %v439, %v440
        %vm445 = vcmp.ge.f32.partialorder %v441, 0.0
        %vm446 = vcmp.ge.f32.partialorder %v442, 0.0
        %vm447 = vcmp.ge.f32.partialorder %v443, 0.0
        %vm448 = vcmp.ge.f32.partialorder %v444, 0.0
        %v449 = vstv %s325
        %v450 = vmul.f32 %v449, %v441
        %v451 = vmul.f32 %v449, %v442
        %v452 = vmul.f32 %v449, %v443
        %v453 = vmul.f32 %v449, %v444
        %v454 = vsel %vm445, %v441, %v450
        %v455 = vsel %vm446, %v442, %v451
        %v456 = vsel %vm447, %v443, %v452
        %v457 = vsel %vm448, %v444, %v453
        %v458 = vsub.f32 0.0, %v454
        %v459 = vsub.f32 0.0, %v455
        %v460 = vsub.f32 0.0, %v456
        %v461 = vsub.f32 0.0, %v457
        %v462 = vmul.f32 %v458, 1.442695
        %v463 = vpow.pop %v462
        %v464 = vmul.f32 %v459, 1.442695
        %v465 = vpow.pop %v464
        %v466 = vmul.f32 %v460, 1.442695
        %v467 = vpow.pop %v466
        %v468 = vmul.f32 %v461, 1.442695
        %v469 = vpow.pop %v468
        %v470 = vadd.f32 %v463, 1.0
        %v471 = vadd.f32 %v465, 1.0
        %v472 = vadd.f32 %v467, 1.0
        %v473 = vadd.f32 %v469, 1.0
        %v474 = vrcp.pop %v470
        %v475 = vrcp.pop %v471
        %v476 = vrcp.pop %v472
        %v477 = vrcp.pop %v473
        %479 = vset.pattern.permute.xlu0 0
        %480 = vperm.xlu0 %479, %v474
        %v481 = vpop.permute.xlu0 %480
        %484 = vset.pattern.permute.xlu0 0
        %485 = vperm.xlu0 %484, %v475
        %v486 = vpop.permute.xlu0 %485
        %489 = vset.pattern.permute.xlu0 0
        %490 = vperm.xlu0 %489, %v476
        %v491 = vpop.permute.xlu0 %490
        %494 = vset.pattern.permute.xlu0 0
        %495 = vperm.xlu0 %494, %v477
        %v496 = vpop.permute.xlu0 %495
        %v498 = vmul.f32 %v195, %v481
        %v499 = vmul.f32 %v196, %v486
        %v500 = vmul.f32 %v197, %v491
        %v501 = vmul.f32 %v198, %v496
        %v502 = vlaneseq
        %v503 = vshrl.u32 %v502, 7
        %v504 = vsub.s32 0, %v503
        %v505 = vrot.slane %v302, %v504
        %v506 = vlaneseq
        %v507 = vshrl.u32 %v506, 7
        %v508 = vsub.s32 0, %v507
        %v509 = vrot.slane %v303, %v508
        %v510 = vmul.f32 %v498, %v505
        %v511 = vmul.f32 %v499, %v505
        %v512 = vmul.f32 %v500, %v509
        %v513 = vmul.f32 %v501, %v509
        %514 = vst [vmem:[%s182] sm:$0xff] %v510
        %515 = vst [vmem:[%s182 + $0x8] sm:$0xff] %v511
        %516 = vst [vmem:[%s182 + $0x10] sm:$0xff] %v512
        %517 = vst [vmem:[%s182 + $0x18] sm:$0xff] %v513
        %s518 = sand.u32 %s75, 1
        %s519 = scalar_lea.sflag [#allocation4], %s518
        %s520 = sand.u32 %s75, 1
        %s521 = smul.addr %s520, 32
        %s522 = scalar_lea.vmem [#allocation7], %s521
        // Predicated region
        $region37: #{tpu_custom_call.1} parent=27 // pred_check
          %p523 = pneg %p85
        $region38: #{tpu_custom_call.1} parent=27 // pred_check_branch
          %525 = sbr.rel (%p523) target = $region40
        $region39: #{tpu_custom_call.1} parent=27 // pred_region
          %s526 = smul.u32 2, %s20
          %s527 = ssub.s32 5, %s526
          %p528 = scmp.lt.s32.totalorder %s527, 2
          %s529 = scalar_select %p528, %s527, 2
          %s530 = smul.u32 128, %s529
          %s531 = smul.u32 %s530, 2
          %s533 = ssub.s32 512, %s531
          %534 = vsyncadd %s519, %s533
          %p535 = scmp.ne.s32.totalorder 0, %s531
          %s536 = smul.addr %s526, 2
          %s537 = smul.addr %s536, 128
          %s538 = scalar_lea.hbm %s2, %s537
          %s539 = smul.u32 %s529, 2
          %s540 = smul.u32 8, %s539
          %s541 = sshll.u32 %s522, 4
          %s542 = int_to_ptr.vmem [resolvable:$true] %s541
          %s543 = sshll.u32 %s540, 4
          %547 = dma.vmem_to_hbm [thread:$0]  (%p535), %s542, %s543, %s538, %s519, 128, 128, 8
        $region40: #{tpu_custom_call.1} parent=27 // pred_fallthru
          _
      $region28: #{tpu_custom_call.1} parent=5 // pred_fallthru
        _
      %p548 = scmp.le.s32.totalorder 2, %s15
      // Predicated region
      $region41: #{tpu_custom_call.1} parent=5 // pred_check
        %p549 = pneg %p548
      $region42: #{tpu_custom_call.1} parent=5 // pred_check_branch
        %551 = sbr.rel (%p549) target = $region44
      $region43: #{tpu_custom_call.1} parent=5 // pred_region
        %s552 = ssub.s32 %s15, 2
        // Predicated region
        $region45: #{tpu_custom_call.1} parent=43 // pred_check
          %p553 = pneg %p91
        $region46: #{tpu_custom_call.1} parent=43 // pred_check_branch
          %555 = sbr.rel (%p553) target = $region48
        $region47: #{tpu_custom_call.1} parent=43 // pred_region
          %s556 = sand.u32 %s76, 1
          %s557 = scalar_lea.sflag [#allocation4], %s556
          %s558 = sand.u32 %s76, 1
          %s559 = smul.addr %s558, 32
          %s560 = scalar_lea.vmem [#allocation7], %s559
          %561 = dma.done %s557, 512
        $region48: #{tpu_custom_call.1} parent=43 // pred_fallthru
          _
      $region44: #{tpu_custom_call.1} parent=5 // pred_fallthru
        _
    $region6: #{tpu_custom_call.1} parent=1 // loop_footer
      %s19 = sadd.s32 1, %s15
    $region7: #{tpu_custom_call.1} parent=1 // loop_footer_branch
      %14 = sbr.rel target = $region3
    $region8: #{tpu_custom_call.1} parent=1 // loop_exit
      _
    %562 = vsyncpa [#allocation3], 1
    %s563 = scalar_lea.sflag [#allocation3], 1
    %564 = vsyncpa %s563, 1
    %565 = vsyncpa [#allocation4], 1
    %s566 = scalar_lea.sflag [#allocation4], 1
    %567 = vsyncpa %s566, 1
    %568 = vsyncpa [#allocation5], 1
    %s569 = scalar_lea.sflag [#allocation5], 1
    %570 = vsyncpa %s569, 1

</llo_original>
